<compile_context>
chip_gen: v7x
topology: tpu7x:2x2x1
jax: 0.10.0
libtpu: 0.0.40
codegen_flags: <defaults>
</compile_context>

<pallas_src>
import functools

import jax
import jax.numpy as jnp
from jax.experimental import pallas as pl
from jax.experimental.pallas import tpu as pltpu


def _round_up(n: int, m: int) -> int:
    return ((n + m - 1) // m) * m


def _pad2d(a, rows, cols):
    r, c = a.shape
    return jnp.pad(a, ((0, rows - r), (0, cols - c)))


# ----------------------------------------------------------------------------
# Kernel: one (TB, in_p) batch tile; all three matmuls + bias + ReLU fused.
# Matmul inputs are bf16 (MXU-native); accumulation, bias add and ReLU are f32.
# ----------------------------------------------------------------------------
def _mlp_kernel(x_ref, w1_ref, b1_ref, w2_ref, b2_ref, w3_ref, b3_ref, o_ref):
    x = x_ref[...].astype(w1_ref.dtype)  # f32 -> bf16 cast on the VPU (free slot)
    h1 = jnp.dot(x, w1_ref[...], preferred_element_type=jnp.float32) + b1_ref[...]
    h1 = jnp.maximum(h1, 0.0)
    h2 = jnp.dot(h1.astype(w2_ref.dtype), w2_ref[...],
                 preferred_element_type=jnp.float32) + b2_ref[...]
    h2 = jnp.maximum(h2, 0.0)
    out = jnp.dot(h2.astype(w3_ref.dtype), w3_ref[...],
                  preferred_element_type=jnp.float32) + b3_ref[...]
    o_ref[...] = out.astype(o_ref.dtype)


# ----------------------------------------------------------------------------
# One-time weight prepack: pad every matmul dim to a multiple of 128 and cast
# the weights to bf16. Done once, outside the per-call forward.
# ----------------------------------------------------------------------------
def prepare_params(params, compute_dtype=jnp.bfloat16):
    w1, b1, w2, b2, w3, b3 = params
    in_f, h1f = w1.shape
    h2f = w2.shape[1]
    out_f = w3.shape[1]
    in_p = _round_up(in_f, 128)
    h1_p = _round_up(h1f, 128)
    h2_p = _round_up(h2f, 128)
    out_p = _round_up(out_f, 128)

    def pad_w(w, r, c):
        return _pad2d(jnp.asarray(w, jnp.float32), r, c).astype(compute_dtype)

    def pad_b(b, c):
        b = jnp.asarray(b, jnp.float32).reshape(1, -1)   # accept (h,) or (1, h)
        return _pad2d(b, 1, c)

    packed = (pad_w(w1, in_p, h1_p), pad_b(b1, h1_p),
              pad_w(w2, h1_p, h2_p), pad_b(b2, h2_p),
              pad_w(w3, h2_p, out_p), pad_b(b3, out_p))
    return jax.block_until_ready(packed)


# ----------------------------------------------------------------------------
# Generation-aware VMEM budgeting.
# ----------------------------------------------------------------------------
def _vmem_budget_bytes() -> int:
    try:
        cap = int(pltpu.get_tpu_info().vmem_capacity_bytes)
    except Exception:
        cap = 64 << 20  # conservative: v7x per-TC capacity
    headroom = (8 << 20) if cap <= (64 << 20) else (16 << 20)
    return cap - headroom  # ~56 MiB on v7x, ~112 MiB on v5e/v6e


def _vmem_estimate(tb, in_p, h1_p, h2_p, out_p) -> int:
    w_bytes = (in_p * h1_p + h1_p * h2_p + h2_p * out_p) * 2     # bf16, Buffered(1)
    b_bytes = 8 * (h1_p + h2_p + out_p) * 4                      # (1,h) pads to 8 sublanes
    x_bytes = 2 * tb * in_p * 4                                  # f32 x, double-buffered
    o_bytes = 2 * tb * out_p * 4                                 # f32 out, double-buffered
    tmp = tb * (in_p * 2 + (h1_p + h2_p) * 6 + out_p * 4)        # casts + f32 intermediates
    return w_bytes + b_bytes + x_bytes + o_bytes + tmp


# ----------------------------------------------------------------------------
# Forward: windows (B, window_len, datapoint_size) -> (B, target_len, datapoint_size)
# ----------------------------------------------------------------------------
@functools.partial(jax.jit, static_argnums=(2, 3))
def three_fc_forward(windows, packed_params, target_len, datapoint_size):
    w1_p, b1_p, w2_p, b2_p, w3_p, b3_p = packed_params

    B = windows.shape[0]
    x = windows.reshape(B, -1).astype(jnp.float32)   # flatten(start_dim=-2, end_dim=-1)

    in_p, h1_p = w1_p.shape
    h2_p = w2_p.shape[1]
    out_p = w3_p.shape[1]
    out_f = target_len * datapoint_size

    # Batch tile: multiple of 16, as large as the per-core VMEM budget allows.
    budget = _vmem_budget_bytes()
    tb = min(512, _round_up(max(B, 1), 16))
    while tb > 16 and int(_vmem_estimate(tb, in_p, h1_p, h2_p, out_p) * 1.25) > budget:
        tb = max(16, _round_up(tb // 2, 16))
    B_p = _round_up(B, tb)
    grid = (B_p // tb,)

    # Only the activation is padded per call (f32, no bf16 materialization).
    x_pad = _pad2d(x, B_p, in_p)

    # Resident operands: constant block index + single buffer (no re-DMA, no
    # wasted double-buffer VMEM).
    def resident(shape):
        return pl.BlockSpec(shape, lambda i: (0, 0), pipeline_mode=pl.Buffered(1))

    x_spec = pl.BlockSpec((tb, in_p), lambda i: (i, 0))
    out_spec = pl.BlockSpec((tb, out_p), lambda i: (i, 0))

    vmem_est = _vmem_estimate(tb, in_p, h1_p, h2_p, out_p)
    vmem_limit = None
    if int(vmem_est * 1.25) > (16 << 20):           # v5e's conservative scoped default
        vmem_limit = int(min(vmem_est * 1.25, budget))

    flops = 2 * B_p * (in_p * h1_p + h1_p * h2_p + h2_p * out_p)
    bytes_accessed = (
        B_p * in_p * 4                                            # x f32 read
        + (in_p * h1_p + h1_p * h2_p + h2_p * out_p) * 2          # bf16 weights
        + (h1_p + h2_p + out_p) * 4                               # f32 biases
        + B_p * out_p * 4                                         # f32 out write
    )

    out2d = pl.pallas_call(
        _mlp_kernel,
        out_shape=jax.ShapeDtypeStruct((B_p, out_p), jnp.float32),
        grid=grid,
        in_specs=[
            x_spec,
            resident((in_p, h1_p)),
            resident((1, h1_p)),
            resident((h1_p, h2_p)),
            resident((1, h2_p)),
            resident((h2_p, out_p)),
            resident((1, out_p)),
        ],
        out_specs=out_spec,
        compiler_params=pltpu.CompilerParams(
            dimension_semantics=("parallel",),
            vmem_limit_bytes=vmem_limit,
        ),
        cost_estimate=pl.CostEstimate(
            flops=int(flops), transcendentals=0, bytes_accessed=int(bytes_accessed)),
    )(x_pad, w1_p, b1_p, w2_p, b2_p, w3_p, b3_p)

    # Drop padded batch rows / output lanes, then
    # unflatten(dim=-1, sizes=(target_len, datapoint_size)).
    return out2d[:B, :out_f].reshape(B, target_len, datapoint_size)


# ----------------------------------------------------------------------------
# Deterministic init mimicking nn.Linear's U(-1/sqrt(fan_in), 1/sqrt(fan_in)).
# Weights stored as (in, out) so the kernel computes x @ W + b.
# ----------------------------------------------------------------------------
def init_params(key, window_len, datapoint_size, target_len,
                hidden_layer1_size, hidden_layer2_size):
    in_f = window_len * datapoint_size
    out_f = target_len * datapoint_size
    dims = [(in_f, hidden_layer1_size),
            (hidden_layer1_size, hidden_layer2_size),
            (hidden_layer2_size, out_f)]
    params = []
    keys = jax.random.split(key, 2 * len(dims))
    for i, (fan_in, fan_out) in enumerate(dims):
        bound = 1.0 / jnp.sqrt(jnp.float32(fan_in))
        w = jax.random.uniform(keys[2 * i], (fan_in, fan_out),
                               minval=-bound, maxval=bound, dtype=jnp.float32)
        b = jax.random.uniform(keys[2 * i + 1], (fan_out,),   # nn.Linear-style (h,) bias
                               minval=-bound, maxval=bound, dtype=jnp.float32)
        params += [w, b]
    return tuple(params)


if __name__ == "__main__":
    # Small shapes consistent with the module's forward.
    batch = 2
    window_len = 8
    datapoint_size = 4
    target_len = 1
    hidden1 = 32
    hidden2 = 32

    key = jax.random.PRNGKey(0)
    k_x, k_p = jax.random.split(key)
    windows = jax.random.normal(
        k_x, (batch, window_len, datapoint_size), dtype=jnp.float32)
    params = init_params(k_p, window_len, datapoint_size, target_len,
                         hidden1, hidden2)

    # One-time weight prepack (pad + bf16 cast), then the per-call forward only
    # streams activations through HBM.
    packed = prepare_params(params)

    out = three_fc_forward(windows, packed, target_len, datapoint_size)
    out = jax.block_until_ready(out)

    # Pure-JAX f32 reference (same math as the PyTorch forward). The kernel
    # uses bf16 MXU inputs with f32 accumulation, so tolerance is loosened.
    w1, b1, w2, b2, w3, b3 = params
    xr = windows.reshape(batch, -1)
    ref = jnp.maximum(xr @ w1 + b1[None, :], 0.0)
    ref = jnp.maximum(ref @ w2 + b2[None, :], 0.0)
    ref = (ref @ w3 + b3[None, :]).reshape(batch, target_len, datapoint_size)

    assert out.shape == (batch, target_len, datapoint_size)
    assert jnp.allclose(out, ref, atol=2e-2, rtol=2e-2), (out, ref)

    print("KERNEL_OK")
</pallas_src>

<mosaic_0001>
module attributes {stable_mosaic.version = 11 : i64} {
  func.func @_mlp_kernel(%arg0: i32, %arg1: memref<16x128xf32, #tpu.memory_space<vmem>>, %arg2: memref<128x128xbf16, #tpu.memory_space<vmem>>, %arg3: memref<1x128xf32, #tpu.memory_space<vmem>>, %arg4: memref<128x128xbf16, #tpu.memory_space<vmem>>, %arg5: memref<1x128xf32, #tpu.memory_space<vmem>>, %arg6: memref<128x128xbf16, #tpu.memory_space<vmem>>, %arg7: memref<1x128xf32, #tpu.memory_space<vmem>>, %arg8: memref<16x128xf32, #tpu.memory_space<vmem>>) attributes {dimension_semantics = [#tpu.dimension_semantics<parallel>], iteration_bounds = array<i64: 1>, scalar_prefetch = 0 : i64, scratch_operands = 0 : i64, tpu.core_type = #tpu.core_type<tc>, window_params = [{transform_indices = @transform_0, window_bounds = array<i64: 16, 128>}, {pipeline_mode = #tpu.pipeline_mode<synchronous>, transform_indices = @transform_1, window_bounds = array<i64: 128, 128>}, {pipeline_mode = #tpu.pipeline_mode<synchronous>, transform_indices = @transform_2, window_bounds = array<i64: 1, 128>}, {pipeline_mode = #tpu.pipeline_mode<synchronous>, transform_indices = @transform_3, window_bounds = array<i64: 128, 128>}, {pipeline_mode = #tpu.pipeline_mode<synchronous>, transform_indices = @transform_4, window_bounds = array<i64: 1, 128>}, {pipeline_mode = #tpu.pipeline_mode<synchronous>, transform_indices = @transform_5, window_bounds = array<i64: 128, 128>}, {pipeline_mode = #tpu.pipeline_mode<synchronous>, transform_indices = @transform_6, window_bounds = array<i64: 1, 128>}, {transform_indices = @transform_7, window_bounds = array<i64: 16, 128>}]} {
    %c0 = arith.constant 0 : index
    %c0_0 = arith.constant 0 : index
    %0 = vector.load %arg1[%c0, %c0_0] : memref<16x128xf32, #tpu.memory_space<vmem>>, vector<16x128xf32>
    %1 = arith.truncf %0 : vector<16x128xf32> to vector<16x128xbf16>
    %c0_1 = arith.constant 0 : index
    %c0_2 = arith.constant 0 : index
    %2 = vector.load %arg2[%c0_1, %c0_2] : memref<128x128xbf16, #tpu.memory_space<vmem>>, vector<128x128xbf16>
    %cst = arith.constant dense<0.000000e+00> : vector<16x128xf32>
    %3 = tpu.matmul %1, %2, %cst {dimension_numbers = #tpu.dot_dimension_numbers<[1], [0], [0], [1], [0, 0, 1, 1], [], []>} : vector<16x128xbf16>, vector<128x128xbf16>, vector<16x128xf32> -> vector<16x128xf32>
    %c0_3 = arith.constant 0 : index
    %c0_4 = arith.constant 0 : index
    %4 = vector.load %arg3[%c0_3, %c0_4] : memref<1x128xf32, #tpu.memory_space<vmem>>, vector<1x128xf32>
    %5 = vector.broadcast %4 : vector<1x128xf32> to vector<16x128xf32>
    %6 = arith.addf %3, %5 : vector<16x128xf32>
    %cst_5 = arith.constant 0.000000e+00 : f32
    %7 = vector.broadcast %cst_5 : f32 to vector<16x128xf32>
    %8 = arith.maximumf %6, %7 : vector<16x128xf32>
    %9 = arith.truncf %8 : vector<16x128xf32> to vector<16x128xbf16>
    %c0_6 = arith.constant 0 : index
    %c0_7 = arith.constant 0 : index
    %10 = vector.load %arg4[%c0_6, %c0_7] : memref<128x128xbf16, #tpu.memory_space<vmem>>, vector<128x128xbf16>
    %cst_8 = arith.constant dense<0.000000e+00> : vector<16x128xf32>
    %11 = tpu.matmul %9, %10, %cst_8 {dimension_numbers = #tpu.dot_dimension_numbers<[1], [0], [0], [1], [0, 0, 1, 1], [], []>} : vector<16x128xbf16>, vector<128x128xbf16>, vector<16x128xf32> -> vector<16x128xf32>
    %c0_9 = arith.constant 0 : index
    %c0_10 = arith.constant 0 : index
    %12 = vector.load %arg5[%c0_9, %c0_10] : memref<1x128xf32, #tpu.memory_space<vmem>>, vector<1x128xf32>
    %13 = vector.broadcast %12 : vector<1x128xf32> to vector<16x128xf32>
    %14 = arith.addf %11, %13 : vector<16x128xf32>
    %cst_11 = arith.constant 0.000000e+00 : f32
    %15 = vector.broadcast %cst_11 : f32 to vector<16x128xf32>
    %16 = arith.maximumf %14, %15 : vector<16x128xf32>
    %17 = arith.truncf %16 : vector<16x128xf32> to vector<16x128xbf16>
    %c0_12 = arith.constant 0 : index
    %c0_13 = arith.constant 0 : index
    %18 = vector.load %arg6[%c0_12, %c0_13] : memref<128x128xbf16, #tpu.memory_space<vmem>>, vector<128x128xbf16>
    %cst_14 = arith.constant dense<0.000000e+00> : vector<16x128xf32>
    %19 = tpu.matmul %17, %18, %cst_14 {dimension_numbers = #tpu.dot_dimension_numbers<[1], [0], [0], [1], [0, 0, 1, 1], [], []>} : vector<16x128xbf16>, vector<128x128xbf16>, vector<16x128xf32> -> vector<16x128xf32>
    %c0_15 = arith.constant 0 : index
    %c0_16 = arith.constant 0 : index
    %20 = vector.load %arg7[%c0_15, %c0_16] : memref<1x128xf32, #tpu.memory_space<vmem>>, vector<1x128xf32>
    %21 = vector.broadcast %20 : vector<1x128xf32> to vector<16x128xf32>
    %22 = arith.addf %19, %21 : vector<16x128xf32>
    %c0_17 = arith.constant 0 : index
    %c0_18 = arith.constant 0 : index
    %23 = vector.load %arg8[%c0_17, %c0_18] : memref<16x128xf32, #tpu.memory_space<vmem>>, vector<16x128xf32>
    tpu.vector_store %arg8[%c0_17, %c0_18], %22 {strides = array<i32>} : memref<16x128xf32, #tpu.memory_space<vmem>>, vector<16x128xf32>,
    return
  }
  func.func @transform_0(%arg0: i32) -> (i32, i32) {
    %c0_i32 = arith.constant 0 : i32
    %c0_i32_0 = arith.constant 0 : i32
    return %arg0, %c0_i32 : i32, i32
  }
  func.func @transform_1(%arg0: i32) -> (i32, i32) {
    %c0_i32 = arith.constant 0 : i32
    %c0_i32_0 = arith.constant 0 : i32
    %c0_i32_1 = arith.constant 0 : i32
    return %c0_i32, %c0_i32_0 : i32, i32
  }
  func.func @transform_2(%arg0: i32) -> (i32, i32) {
    %c0_i32 = arith.constant 0 : i32
    %c0_i32_0 = arith.constant 0 : i32
    %c0_i32_1 = arith.constant 0 : i32
    return %c0_i32, %c0_i32_0 : i32, i32
  }
  func.func @transform_3(%arg0: i32) -> (i32, i32) {
    %c0_i32 = arith.constant 0 : i32
    %c0_i32_0 = arith.constant 0 : i32
    %c0_i32_1 = arith.constant 0 : i32
    return %c0_i32, %c0_i32_0 : i32, i32
  }
  func.func @transform_4(%arg0: i32) -> (i32, i32) {
    %c0_i32 = arith.constant 0 : i32
    %c0_i32_0 = arith.constant 0 : i32
    %c0_i32_1 = arith.constant 0 : i32
    return %c0_i32, %c0_i32_0 : i32, i32
  }
  func.func @transform_5(%arg0: i32) -> (i32, i32) {
    %c0_i32 = arith.constant 0 : i32
    %c0_i32_0 = arith.constant 0 : i32
    %c0_i32_1 = arith.constant 0 : i32
    return %c0_i32, %c0_i32_0 : i32, i32
  }
  func.func @transform_6(%arg0: i32) -> (i32, i32) {
    %c0_i32 = arith.constant 0 : i32
    %c0_i32_0 = arith.constant 0 : i32
    %c0_i32_1 = arith.constant 0 : i32
    return %c0_i32, %c0_i32_0 : i32, i32
  }
  func.func @transform_7(%arg0: i32) -> (i32, i32) {
    %c0_i32 = arith.constant 0 : i32
    %c0_i32_0 = arith.constant 0 : i32
    return %arg0, %c0_i32 : i32, i32
  }
}

</mosaic_0001>

<llo_original>
// kernel: three_fc_forward.1
$region0: #{three_fc_forward.1}
  #allocation0 [shape = 'u32[]', space=smem, size = 0x4, offset = 0x4, fixed_abs, tag = 'smem constant byte address 0x4 - core index']
  #allocation1 [shape = 'u32[144,128]{1,0:T(1,128)}', space=vmem, size = 0x12000, scoped, tag = 'internal scratch']
  %s0 = inlined_call_operand.vmem [shape: f32[16,128], index: 0, kind: input, shape index: {}]
  %s1 = inlined_call_operand.vmem [shape: bf16[128,128], index: 1, kind: input, shape index: {}]
  %s2 = inlined_call_operand.vmem [shape: f32[1,128], index: 2, kind: input, shape index: {}]
  %s3 = inlined_call_operand.hbm [shape: bf16[128,128], index: 3, kind: input, shape index: {}]
  %s4 = inlined_call_operand.vmem [shape: f32[1,128], index: 4, kind: input, shape index: {}]
  %s5 = inlined_call_operand.hbm [shape: bf16[128,128], index: 5, kind: input, shape index: {}]
  %s6 = inlined_call_operand.vmem [shape: f32[1,128], index: 6, kind: input, shape index: {}]
  %s7 = inlined_call_operand.vmem [shape: f32[16,128], index: 7, kind: output, shape index: {}]
  %s8 = sld [smem:[#allocation0]]
  $region46: #{three_fc_forward.1} parent=0
    _
  %s10 = ssub.s32 1, %s8
  %s11 = scalar_select 0, %s10, %s8
  $region1: #{three_fc_forward.1} parent=0
    #allocation2 [shape = 'u8[32768]{0}', space=vmem, size = 0x8000, scoped, tag = 'input window, operand 3, single buffered']
    #allocation3 [shape = 's32[1]{0}', space=sflag, size = 0x4, scoped, tag = 'scoped memory for three_fc_forward.1']
    #allocation4 [shape = 'u8[32768]{0}', space=vmem, size = 0x8000, scoped, tag = 'input window, operand 5, single buffered']
    #allocation5 [shape = 's32[1]{0}', space=sflag, size = 0x4, scoped, tag = 'scoped memory for three_fc_forward.1']
    %12 = vsyncpa [#allocation3], 0
    %13 = vsyncpa [#allocation5], 0
    // Predicated region
    $region2: #{three_fc_forward.1} parent=1 // pred_check
      _
    $region3: #{three_fc_forward.1} parent=1 // pred_check_branch
      %15 = sbr.rel (0) target = $region5
    $region4: #{three_fc_forward.1} parent=1 // pred_region
      _
    $region5: #{three_fc_forward.1} parent=1 // pred_fallthru
      _
    // Predicated region
    $region6: #{three_fc_forward.1} parent=1 // pred_check
      _
    $region7: #{three_fc_forward.1} parent=1 // pred_check_branch
      %17 = sbr.rel (0) target = $region9
    $region8: #{three_fc_forward.1} parent=1 // pred_region
      _
    $region9: #{three_fc_forward.1} parent=1 // pred_fallthru
      _
    // Predicated region
    $region10: #{three_fc_forward.1} parent=1 // pred_check
      _
    $region11: #{three_fc_forward.1} parent=1 // pred_check_branch
      %19 = sbr.rel (0) target = $region13
    $region12: #{three_fc_forward.1} parent=1 // pred_region
      _
    $region13: #{three_fc_forward.1} parent=1 // pred_fallthru
      _
    // Predicated region
    $region14: #{three_fc_forward.1} parent=1 // pred_check
      _
    $region15: #{three_fc_forward.1} parent=1 // pred_check_branch
      %21 = sbr.rel (0) target = $region17
    $region16: #{three_fc_forward.1} parent=1 // pred_region
      %s23 = ssub.s32 1024, 1024
      %24 = vsyncadd [#allocation3], %s23
      %s25 = sshll.u32 [#allocation2], 4
      %s26 = int_to_ptr.vmem [resolvable:$true] %s25
      %31 = dma.hbm_to_vmem [thread:$0]  %s3, 1024, %s26, [#allocation3], 64, 64, 4
    $region17: #{three_fc_forward.1} parent=1 // pred_fallthru
      _
    // Predicated region
    $region18: #{three_fc_forward.1} parent=1 // pred_check
      _
    $region19: #{three_fc_forward.1} parent=1 // pred_check_branch
      %33 = sbr.rel (0) target = $region21
    $region20: #{three_fc_forward.1} parent=1 // pred_region
      _
    $region21: #{three_fc_forward.1} parent=1 // pred_fallthru
      _
    // Predicated region
    $region22: #{three_fc_forward.1} parent=1 // pred_check
      _
    $region23: #{three_fc_forward.1} parent=1 // pred_check_branch
      %35 = sbr.rel (0) target = $region25
    $region24: #{three_fc_forward.1} parent=1 // pred_region
      %s37 = ssub.s32 1024, 1024
      %38 = vsyncadd [#allocation5], %s37
      %s39 = sshll.u32 [#allocation4], 4
      %s40 = int_to_ptr.vmem [resolvable:$true] %s39
      %45 = dma.hbm_to_vmem [thread:$0]  %s5, 1024, %s40, [#allocation5], 64, 64, 4
    $region25: #{three_fc_forward.1} parent=1 // pred_fallthru
      _
    // Predicated region
    $region26: #{three_fc_forward.1} parent=1 // pred_check
      _
    $region27: #{three_fc_forward.1} parent=1 // pred_check_branch
      %47 = sbr.rel (0) target = $region29
    $region28: #{three_fc_forward.1} parent=1 // pred_region
      _
    $region29: #{three_fc_forward.1} parent=1 // pred_fallthru
      _
    // Predicated region
    $region30: #{three_fc_forward.1} parent=1 // pred_check
      _
    $region31: #{three_fc_forward.1} parent=1 // pred_check_branch
      %49 = sbr.rel (0) target = $region33
    $region32: #{three_fc_forward.1} parent=1 // pred_region
      %50 = dma.done [#allocation3], 1024
    $region33: #{three_fc_forward.1} parent=1 // pred_fallthru
      _
    // Predicated region
    $region34: #{three_fc_forward.1} parent=1 // pred_check
      _
    $region35: #{three_fc_forward.1} parent=1 // pred_check_branch
      %52 = sbr.rel (0) target = $region37
    $region36: #{three_fc_forward.1} parent=1 // pred_region
      %53 = dma.done [#allocation5], 1024
    $region37: #{three_fc_forward.1} parent=1 // pred_fallthru
      _
    %v55 = vld [vmem:[%s0] sm:$0xff]
    %v56 = vld [vmem:[%s0 + $0x8] sm:$0xff]
    %v57 = vpack.c.bf16 %v56, %v55
    %v58 = vld [vmem:[%s1] sm:$0xf]
    %v59 = vld [vmem:[%s1 + $0x4] sm:$0xf]
    %v60 = vld [vmem:[%s1 + $0x8] sm:$0xf]
    %v61 = vld [vmem:[%s1 + $0xc] sm:$0xf]
    %v62 = vld [vmem:[%s1 + $0x10] sm:$0xf]
    %v63 = vld [vmem:[%s1 + $0x14] sm:$0xf]
    %v64 = vld [vmem:[%s1 + $0x18] sm:$0xf]
    %v65 = vld [vmem:[%s1 + $0x1c] sm:$0xf]
    %v66 = vld [vmem:[%s1 + $0x20] sm:$0xf]
    %v67 = vld [vmem:[%s1 + $0x24] sm:$0xf]
    %v68 = vld [vmem:[%s1 + $0x28] sm:$0xf]
    %v69 = vld [vmem:[%s1 + $0x2c] sm:$0xf]
    %v70 = vld [vmem:[%s1 + $0x30] sm:$0xf]
    %v71 = vld [vmem:[%s1 + $0x34] sm:$0xf]
    %v72 = vld [vmem:[%s1 + $0x38] sm:$0xf]
    %v73 = vld [vmem:[%s1 + $0x3c] sm:$0xf]
    %v74 = vld [vmem:[%s2] sm:$0x1]
    %v76 = vlaneseq
    %v77 = vshrl.u32 %v76, 7
    %v78 = vsub.s32 0, %v77
    %v79 = vrot.slane %v74, %v78
    %v97 = vunpack.c.l.b16 %v58
    %v98 = vunpack.c.l.b16 %v59
    %v99 = vunpack.c.l.b16 %v60
    %v100 = vunpack.c.l.b16 %v61
    %v101 = vunpack.c.l.b16 %v62
    %v102 = vunpack.c.l.b16 %v63
    %v103 = vunpack.c.l.b16 %v64
    %v104 = vunpack.c.l.b16 %v65
    %v105 = vunpack.c.l.b16 %v66
    %v106 = vunpack.c.l.b16 %v67
    %v107 = vunpack.c.l.b16 %v68
    %v108 = vunpack.c.l.b16 %v69
    %v109 = vunpack.c.l.b16 %v70
    %v110 = vunpack.c.l.b16 %v71
    %v111 = vunpack.c.l.b16 %v72
    %v112 = vunpack.c.l.b16 %v73
    %v113 = vpack.c.b16 %v98, %v97
    %v114 = vpack.c.b16 %v100, %v99
    %v115 = vpack.c.b16 %v102, %v101
    %v116 = vpack.c.b16 %v104, %v103
    %v117 = vpack.c.b16 %v106, %v105
    %v118 = vpack.c.b16 %v108, %v107
    %v119 = vpack.c.b16 %v110, %v109
    %v120 = vpack.c.b16 %v112, %v111
    %129 = vmatprep.subr.bf16.mxu0 0
    %130 = vmatpush1.bf16.msra.mxu0 %v113
    %131 = vmatprep.subr.bf16.mxu0 0
    %132 = vmatpush1.bf16.msra.mxu0 %v114
    %133 = vmatprep.subr.bf16.mxu0 0
    %134 = vmatpush1.bf16.msra.mxu0 %v115
    %135 = vmatprep.subr.bf16.mxu0 0
    %136 = vmatpush1.bf16.msra.mxu0 %v116
    %137 = vmatprep.subr.bf16.mxu0 0
    %138 = vmatpush1.bf16.msra.mxu0 %v117
    %139 = vmatprep.subr.bf16.mxu0 0
    %140 = vmatpush1.bf16.msra.mxu0 %v118
    %141 = vmatprep.subr.bf16.mxu0 0
    %142 = vmatpush1.bf16.msra.mxu0 %v119
    %143 = vmatprep.subr.bf16.mxu0 0
    %144 = vmatpush1.bf16.msra.mxu0 %v120
    %145 = vmatprep.subr.bf16.mxu0 0
    %146 = vmatpush1.bf16.msra.mxu0 0
    %147 = vmatprep.subr.bf16.mxu0 0
    %148 = vmatpush1.bf16.msra.mxu0 0
    %149 = vmatprep.subr.bf16.mxu0 0
    %150 = vmatpush1.bf16.msra.mxu0 0
    %151 = vmatprep.subr.bf16.mxu0 0
    %152 = vmatpush1.bf16.msra.mxu0 0
    %153 = vmatprep.subr.bf16.mxu0 0
    %154 = vmatpush1.bf16.msra.mxu0 0
    %155 = vmatprep.subr.bf16.mxu0 0
    %156 = vmatpush1.bf16.msra.mxu0 0
    %157 = vmatprep.subr.bf16.mxu0 0
    %158 = vmatpush1.bf16.msra.mxu0 0
    %159 = vmatprep.subr.bf16.mxu0 0
    %160 = vmatpush1.bf16.msra.mxu0 0
    %161 = vmatprep.mubr.bf16.mxu0 0
    %162 = vmatmul.mubr.bf16.gmra.mrb[0].mxu0 %v57
    %v163 = vpop.f32.mrb[0].mxu0
    %v164 = vadd.f32 %v79, %v163
    %v165 = vpop.f32.mrb[0].mxu0
    %v166 = vpop.f32.mrb[0].mxu0
    %v167 = vadd.f32 %v79, %v166
    %v168 = vpop.f32.mrb[0].mxu0
    %169 = vdwg.mxu0
    %v170 = vmax.f32 %v164, 0.0
    %v171 = vmax.f32 %v167, 0.0
    %v172 = vpack.c.bf16 %v171, %v170
    %v173 = vld [vmem:[#allocation2] sm:$0xf]
    %v174 = vld [vmem:[#allocation2 + $0x4] sm:$0xf]
    %v175 = vld [vmem:[#allocation2 + $0x8] sm:$0xf]
    %v176 = vld [vmem:[#allocation2 + $0xc] sm:$0xf]
    %v177 = vld [vmem:[#allocation2 + $0x10] sm:$0xf]
    %v178 = vld [vmem:[#allocation2 + $0x14] sm:$0xf]
    %v179 = vld [vmem:[#allocation2 + $0x18] sm:$0xf]
    %v180 = vld [vmem:[#allocation2 + $0x1c] sm:$0xf]
    %v181 = vld [vmem:[#allocation2 + $0x20] sm:$0xf]
    %v182 = vld [vmem:[#allocation2 + $0x24] sm:$0xf]
    %v183 = vld [vmem:[#allocation2 + $0x28] sm:$0xf]
    %v184 = vld [vmem:[#allocation2 + $0x2c] sm:$0xf]
    %v185 = vld [vmem:[#allocation2 + $0x30] sm:$0xf]
    %v186 = vld [vmem:[#allocation2 + $0x34] sm:$0xf]
    %v187 = vld [vmem:[#allocation2 + $0x38] sm:$0xf]
    %v188 = vld [vmem:[#allocation2 + $0x3c] sm:$0xf]
    %v189 = vld [vmem:[%s4] sm:$0x1]
    %v191 = vlaneseq
    %v192 = vshrl.u32 %v191, 7
    %v193 = vsub.s32 0, %v192
    %v194 = vrot.slane %v189, %v193
    %v212 = vunpack.c.l.b16 %v173
    %v213 = vunpack.c.l.b16 %v174
    %v214 = vunpack.c.l.b16 %v175
    %v215 = vunpack.c.l.b16 %v176
    %v216 = vunpack.c.l.b16 %v177
    %v217 = vunpack.c.l.b16 %v178
    %v218 = vunpack.c.l.b16 %v179
    %v219 = vunpack.c.l.b16 %v180
    %v220 = vunpack.c.l.b16 %v181
    %v221 = vunpack.c.l.b16 %v182
    %v222 = vunpack.c.l.b16 %v183
    %v223 = vunpack.c.l.b16 %v184
    %v224 = vunpack.c.l.b16 %v185
    %v225 = vunpack.c.l.b16 %v186
    %v226 = vunpack.c.l.b16 %v187
    %v227 = vunpack.c.l.b16 %v188
    %v228 = vpack.c.b16 %v213, %v212
    %v229 = vpack.c.b16 %v215, %v214
    %v230 = vpack.c.b16 %v217, %v216
    %v231 = vpack.c.b16 %v219, %v218
    %v232 = vpack.c.b16 %v221, %v220
    %v233 = vpack.c.b16 %v223, %v222
    %v234 = vpack.c.b16 %v225, %v224
    %v235 = vpack.c.b16 %v227, %v226
    %244 = vmatprep.subr.bf16.mxu0 0
    %245 = vmatpush1.bf16.msra.mxu0 %v228
    %246 = vmatprep.subr.bf16.mxu0 0
    %247 = vmatpush1.bf16.msra.mxu0 %v229
    %248 = vmatprep.subr.bf16.mxu0 0
    %249 = vmatpush1.bf16.msra.mxu0 %v230
    %250 = vmatprep.subr.bf16.mxu0 0
    %251 = vmatpush1.bf16.msra.mxu0 %v231
    %252 = vmatprep.subr.bf16.mxu0 0
    %253 = vmatpush1.bf16.msra.mxu0 %v232
    %254 = vmatprep.subr.bf16.mxu0 0
    %255 = vmatpush1.bf16.msra.mxu0 %v233
    %256 = vmatprep.subr.bf16.mxu0 0
    %257 = vmatpush1.bf16.msra.mxu0 %v234
    %258 = vmatprep.subr.bf16.mxu0 0
    %259 = vmatpush1.bf16.msra.mxu0 %v235
    %260 = vmatprep.subr.bf16.mxu0 0
    %261 = vmatpush1.bf16.msra.mxu0 0
    %262 = vmatprep.subr.bf16.mxu0 0
    %263 = vmatpush1.bf16.msra.mxu0 0
    %264 = vmatprep.subr.bf16.mxu0 0
    %265 = vmatpush1.bf16.msra.mxu0 0
    %266 = vmatprep.subr.bf16.mxu0 0
    %267 = vmatpush1.bf16.msra.mxu0 0
    %268 = vmatprep.subr.bf16.mxu0 0
    %269 = vmatpush1.bf16.msra.mxu0 0
    %270 = vmatprep.subr.bf16.mxu0 0
    %271 = vmatpush1.bf16.msra.mxu0 0
    %272 = vmatprep.subr.bf16.mxu0 0
    %273 = vmatpush1.bf16.msra.mxu0 0
    %274 = vmatprep.subr.bf16.mxu0 0
    %275 = vmatpush1.bf16.msra.mxu0 0
    %276 = vmatprep.mubr.bf16.mxu0 0
    %277 = vmatmul.mubr.bf16.gmra.mrb[0].mxu0 %v172
    %v278 = vpop.f32.mrb[0].mxu0
    %v279 = vadd.f32 %v194, %v278
    %v280 = vpop.f32.mrb[0].mxu0
    %v281 = vpop.f32.mrb[0].mxu0
    %v282 = vadd.f32 %v194, %v281
    %v283 = vpop.f32.mrb[0].mxu0
    %284 = vdwg.mxu0
    %v285 = vmax.f32 %v279, 0.0
    %v286 = vmax.f32 %v282, 0.0
    %v287 = vpack.c.bf16 %v286, %v285
    %v288 = vld [vmem:[#allocation4] sm:$0xf]
    %v289 = vld [vmem:[#allocation4 + $0x4] sm:$0xf]
    %v290 = vld [vmem:[#allocation4 + $0x8] sm:$0xf]
    %v291 = vld [vmem:[#allocation4 + $0xc] sm:$0xf]
    %v292 = vld [vmem:[#allocation4 + $0x10] sm:$0xf]
    %v293 = vld [vmem:[#allocation4 + $0x14] sm:$0xf]
    %v294 = vld [vmem:[#allocation4 + $0x18] sm:$0xf]
    %v295 = vld [vmem:[#allocation4 + $0x1c] sm:$0xf]
    %v296 = vld [vmem:[#allocation4 + $0x20] sm:$0xf]
    %v297 = vld [vmem:[#allocation4 + $0x24] sm:$0xf]
    %v298 = vld [vmem:[#allocation4 + $0x28] sm:$0xf]
    %v299 = vld [vmem:[#allocation4 + $0x2c] sm:$0xf]
    %v300 = vld [vmem:[#allocation4 + $0x30] sm:$0xf]
    %v301 = vld [vmem:[#allocation4 + $0x34] sm:$0xf]
    %v302 = vld [vmem:[#allocation4 + $0x38] sm:$0xf]
    %v303 = vld [vmem:[#allocation4 + $0x3c] sm:$0xf]
    %v304 = vld [vmem:[%s6] sm:$0x1]
    %v306 = vlaneseq
    %v307 = vshrl.u32 %v306, 7
    %v308 = vsub.s32 0, %v307
    %v309 = vrot.slane %v304, %v308
    %v327 = vunpack.c.l.b16 %v288
    %v328 = vunpack.c.l.b16 %v289
    %v329 = vunpack.c.l.b16 %v290
    %v330 = vunpack.c.l.b16 %v291
    %v331 = vunpack.c.l.b16 %v292
    %v332 = vunpack.c.l.b16 %v293
    %v333 = vunpack.c.l.b16 %v294
    %v334 = vunpack.c.l.b16 %v295
    %v335 = vunpack.c.l.b16 %v296
    %v336 = vunpack.c.l.b16 %v297
    %v337 = vunpack.c.l.b16 %v298
    %v338 = vunpack.c.l.b16 %v299
    %v339 = vunpack.c.l.b16 %v300
    %v340 = vunpack.c.l.b16 %v301
    %v341 = vunpack.c.l.b16 %v302
    %v342 = vunpack.c.l.b16 %v303
    %v343 = vpack.c.b16 %v328, %v327
    %v344 = vpack.c.b16 %v330, %v329
    %v345 = vpack.c.b16 %v332, %v331
    %v346 = vpack.c.b16 %v334, %v333
    %v347 = vpack.c.b16 %v336, %v335
    %v348 = vpack.c.b16 %v338, %v337
    %v349 = vpack.c.b16 %v340, %v339
    %v350 = vpack.c.b16 %v342, %v341
    %359 = vmatprep.subr.bf16.mxu0 0
    %360 = vmatpush1.bf16.msra.mxu0 %v343
    %361 = vmatprep.subr.bf16.mxu0 0
    %362 = vmatpush1.bf16.msra.mxu0 %v344
    %363 = vmatprep.subr.bf16.mxu0 0
    %364 = vmatpush1.bf16.msra.mxu0 %v345
    %365 = vmatprep.subr.bf16.mxu0 0
    %366 = vmatpush1.bf16.msra.mxu0 %v346
    %367 = vmatprep.subr.bf16.mxu0 0
    %368 = vmatpush1.bf16.msra.mxu0 %v347
    %369 = vmatprep.subr.bf16.mxu0 0
    %370 = vmatpush1.bf16.msra.mxu0 %v348
    %371 = vmatprep.subr.bf16.mxu0 0
    %372 = vmatpush1.bf16.msra.mxu0 %v349
    %373 = vmatprep.subr.bf16.mxu0 0
    %374 = vmatpush1.bf16.msra.mxu0 %v350
    %375 = vmatprep.subr.bf16.mxu0 0
    %376 = vmatpush1.bf16.msra.mxu0 0
    %377 = vmatprep.subr.bf16.mxu0 0
    %378 = vmatpush1.bf16.msra.mxu0 0
    %379 = vmatprep.subr.bf16.mxu0 0
    %380 = vmatpush1.bf16.msra.mxu0 0
    %381 = vmatprep.subr.bf16.mxu0 0
    %382 = vmatpush1.bf16.msra.mxu0 0
    %383 = vmatprep.subr.bf16.mxu0 0
    %384 = vmatpush1.bf16.msra.mxu0 0
    %385 = vmatprep.subr.bf16.mxu0 0
    %386 = vmatpush1.bf16.msra.mxu0 0
    %387 = vmatprep.subr.bf16.mxu0 0
    %388 = vmatpush1.bf16.msra.mxu0 0
    %389 = vmatprep.subr.bf16.mxu0 0
    %390 = vmatpush1.bf16.msra.mxu0 0
    %391 = vmatprep.mubr.bf16.mxu0 0
    %392 = vmatmul.mubr.bf16.gmra.mrb[0].mxu0 %v287
    %v393 = vpop.f32.mrb[0].mxu0
    %v394 = vadd.f32 %v309, %v393
    %v395 = vpop.f32.mrb[0].mxu0
    %v396 = vpop.f32.mrb[0].mxu0
    %v397 = vadd.f32 %v309, %v396
    %v398 = vpop.f32.mrb[0].mxu0
    %399 = vdwg.mxu0
    %400 = vst [vmem:[%s7] sm:$0xff] %v394
    %401 = vst [vmem:[%s7 + $0x8] sm:$0xff] %v397
    // Predicated region
    $region38: #{three_fc_forward.1} parent=1 // pred_check
      _
    $region39: #{three_fc_forward.1} parent=1 // pred_check_branch
      %403 = sbr.rel (0) target = $region41
    $region40: #{three_fc_forward.1} parent=1 // pred_region
      _
    $region41: #{three_fc_forward.1} parent=1 // pred_fallthru
      _
    // Predicated region
    $region42: #{three_fc_forward.1} parent=1 // pred_check
      _
    $region43: #{three_fc_forward.1} parent=1 // pred_check_branch
      %405 = sbr.rel (0) target = $region45
    $region44: #{three_fc_forward.1} parent=1 // pred_region
      _
    $region45: #{three_fc_forward.1} parent=1 // pred_fallthru
      _
    %406 = vsyncpa [#allocation3], 1
    %407 = vsyncpa [#allocation5], 1

</llo_original>
